<compile_context>
chip_gen: v7x
topology: tpu7x:2x2x1
jax: 0.10.0
libtpu: 0.0.40
codegen_flags: <defaults>
</compile_context>

<pallas_src>
import functools

import jax
import jax.numpy as jnp
import numpy as np
from jax.experimental import pallas as pl
from jax.experimental.pallas import tpu as pltpu


def _round_up(x, m):
    return (x + m - 1) // m * m


# ----------------------------------------------------------------------------- kernel
def gripper_decoder_kernel(q_ref, w2q_ref, c2_ref, w3q_ref, w3x_ref, b3_ref,
                           out_ref, *, n_joints):
    """One grid step computes a TN-wide column slab of the fc3 output."""
    # ---- fc2: relu(q @ W2_q + c2) ------------------------------------------
    # c2 already contains b2 + relu(fc1(latent)) @ W2_hidden (batch-invariant).
    h2 = c2_ref[...]                                          # (1, l1)
    for j in range(n_joints):                                 # VPU rank-1 updates
        h2 = h2 + q_ref[:, j:j + 1] * w2q_ref[j:j + 1, :]     # -> (B, l1)
    h2 = jnp.maximum(h2, 0.0)

    # ---- fc3 column tile: h2 @ W3_hidden[:, tile] + q @ W3_q[:, tile] + b3 --
    acc = jnp.dot(h2.astype(w3x_ref.dtype), w3x_ref[...],
                  preferred_element_type=jnp.float32)         # bf16 x bf16 -> f32
    acc = acc + b3_ref[...]
    for j in range(n_joints):
        acc = acc + q_ref[:, j:j + 1] * w3q_ref[j:j + 1, :]
    out_ref[...] = acc.astype(out_ref.dtype)


# ----------------------------------------------------------------------------- wrapper
def gripper_decoder_forward(q, kparams, *, n_joints, n_points):
    """q: any shape whose trailing dims flatten to (-1, n_joints)."""
    w2q = kparams["w2q"]
    c2 = kparams["c2"]
    w3q = kparams["w3q"]
    w3x = kparams["w3x"]
    b3 = kparams["b3"]

    out_dim = n_points * 3
    l1 = w2q.shape[1]
    padded_out = w3x.shape[1]                 # already padded to a 128 multiple

    q2 = jnp.reshape(q, (-1, n_joints)).astype(jnp.float32)
    B = q2.shape[0]
    B_pad = _round_up(max(B, 1), 8)           # f32 sublane alignment
    if B_pad != B:
        q2 = jnp.pad(q2, ((0, B_pad - B), (0, 0)))

    # Output-column tile width: largest lane-aligned divisor of padded_out.
    TN = next(t for t in (512, 256, 128) if padded_out % t == 0)
    n_tiles = padded_out // TN

    flops = 2 * B_pad * (l1 * padded_out + n_joints * (l1 + padded_out))
    bytes_accessed = (q2.size * 4 + w2q.size * 4 + c2.size * 4 + w3q.size * 4
                      + w3x.size * w3x.dtype.itemsize + b3.size * 4
                      + B_pad * padded_out * 4)

    out = pl.pallas_call(
        functools.partial(gripper_decoder_kernel, n_joints=n_joints),
        out_shape=jax.ShapeDtypeStruct((B_pad, padded_out), jnp.float32),
        grid=(n_tiles,),
        in_specs=[
            pl.BlockSpec((B_pad, n_joints), lambda j: (0, 0)),   # q        (resident)
            pl.BlockSpec((n_joints, l1), lambda j: (0, 0)),      # W2_q     (resident)
            pl.BlockSpec((1, l1), lambda j: (0, 0)),             # c2       (resident)
            pl.BlockSpec((n_joints, TN), lambda j: (0, j)),      # W3_q     column tile
            pl.BlockSpec((l1, TN), lambda j: (0, j)),            # W3_hidden column tile (bf16)
            pl.BlockSpec((1, TN), lambda j: (0, j)),             # b3       column tile
        ],
        out_specs=pl.BlockSpec((B_pad, TN), lambda j: (0, j)),
        compiler_params=pltpu.CompilerParams(
            dimension_semantics=("parallel",)),                  # megacore split on v7x
        cost_estimate=pl.CostEstimate(flops=int(flops), transcendentals=0,
                                      bytes_accessed=int(bytes_accessed)),
    )(q2, w2q, c2, w3q, w3x, b3)

    out = out[:B, :out_dim]
    return jnp.reshape(out, (-1, n_points, 3))


# ----------------------------------------------------------------------------- params
def init_params(key, *, n_joints, n_points, layers, n_latent):
    """Raw (PyTorch-equivalent) parameters; weights stored (in_features, out_features)."""
    l0, l1 = layers
    out_dim = n_points * 3
    ks = jax.random.split(key, 7)

    def ku(k, fan_in, shape):
        bound = float(np.sqrt(6.0 / fan_in))
        return jax.random.uniform(k, shape, jnp.float32, -bound, bound)

    lat = ku(ks[0], n_latent, (1, n_latent))
    w1 = ku(ks[1], n_latent, (n_latent, l0))
    b1 = ku(ks[2], n_latent, (1, l0))
    w2 = ku(ks[3], n_joints + l0, (n_joints + l0, l1))
    b2 = ku(ks[4], n_joints + l0, (1, l1))
    w3 = ku(ks[5], n_joints + l1, (n_joints + l1, out_dim))
    b3 = ku(ks[6], n_joints + l1, (1, out_dim))
    return (lat, w1, b1, w2, b2, w3, b3)


def prepare_kernel_params(raw, *, n_joints, n_points, big_dtype=jnp.bfloat16):
    """Once-per-weight-update precompute: fold the latent path, split/pad weights."""
    lat, w1, b1, w2, b2, w3, b3 = raw
    out_dim = n_points * 3

    # Batch-invariant latent path folded into an effective fc2 bias (exact).
    h1 = jax.nn.relu(lat @ w1 + b1)                  # (1, l0)
    c2 = h1 @ w2[n_joints:] + b2                     # (1, l1)
    w2q = w2[:n_joints]                              # (n_joints, l1)

    w3q = w3[:n_joints]                              # (n_joints, out_dim)
    w3x = w3[n_joints:]                              # (l1, out_dim)

    # Pad fc3 output columns to a lane-aligned width (unmasked stores in-kernel).
    padded_out = _round_up(out_dim, 128)
    pad = padded_out - out_dim
    if pad:
        w3q = jnp.pad(w3q, ((0, 0), (0, pad)))
        w3x = jnp.pad(w3x, ((0, 0), (0, pad)))
        b3 = jnp.pad(b3, ((0, 0), (0, pad)))

    return {
        "w2q": w2q.astype(jnp.float32),
        "c2": c2.astype(jnp.float32),
        "w3q": w3q.astype(jnp.float32),
        "w3x": w3x.astype(big_dtype),                # dominant weight in bf16
        "b3": b3.astype(jnp.float32),
    }


# ----------------------------------------------------------------------------- references
def reference_forward_f32(q, raw, *, n_joints, n_points):
    """Pure-JAX, all-f32 mirror of the PyTorch forward (real concats)."""
    lat, w1, b1, w2, b2, w3, b3 = raw
    q2 = jnp.reshape(q, (-1, n_joints)).astype(jnp.float32)
    B = q2.shape[0]
    x = jnp.broadcast_to(lat, (B, lat.shape[1]))
    x = jax.nn.relu(x @ w1 + b1)
    x = jnp.concatenate([q2, x], axis=1)
    x = jax.nn.relu(x @ w2 + b2)
    x = jnp.concatenate([q2, x], axis=1)
    x = x @ w3 + b3
    return jnp.reshape(x, (-1, n_points, 3))


def reference_forward_mirror(q, kparams, *, n_joints, n_points):
    """Pure-JAX replay of the kernel arithmetic (same folded params, bf16 fc3 inputs)."""
    w2q, c2 = kparams["w2q"], kparams["c2"]
    w3q, w3x, b3 = kparams["w3q"], kparams["w3x"], kparams["b3"]
    out_dim = n_points * 3
    q2 = jnp.reshape(q, (-1, n_joints)).astype(jnp.float32)
    h2 = c2
    for j in range(n_joints):
        h2 = h2 + q2[:, j:j + 1] * w2q[j:j + 1, :]
    h2 = jax.nn.relu(h2)
    out = jnp.dot(h2.astype(w3x.dtype), w3x, preferred_element_type=jnp.float32)
    out = out + b3
    for j in range(n_joints):
        out = out + q2[:, j:j + 1] * w3q[j:j + 1, :]
    out = out[:, :out_dim]
    return jnp.reshape(out, (-1, n_points, 3))


# ----------------------------------------------------------------------------- demo / test
if __name__ == "__main__":
    # Small but representative shapes; deliberately non-aligned to exercise the
    # wrapper's batch (6->8) and output-column (1500->1536) padding guards.
    n_joints = 1
    n_points = 500            # fc3 out dim = 1500 -> padded to 1536 in the wrapper
    layers = (256, 512)
    n_latent = 16
    batch = 6                 # padded to 8 rows in the wrapper

    key = jax.random.PRNGKey(0)
    k_param, k_q = jax.random.split(key)
    raw = init_params(k_param, n_joints=n_joints, n_points=n_points,
                      layers=layers, n_latent=n_latent)
    kparams = prepare_kernel_params(raw, n_joints=n_joints, n_points=n_points)

    q = jax.random.uniform(k_q, (batch, n_joints), jnp.float32)

    out = gripper_decoder_forward(q, kparams, n_joints=n_joints, n_points=n_points)
    out = jax.block_until_ready(out)
    assert out.shape == (batch, n_points, 3)

    # Tight check vs a pure-JAX replay of the kernel's exact arithmetic.
    ref_mirror = reference_forward_mirror(q, kparams, n_joints=n_joints, n_points=n_points)
    np.testing.assert_allclose(np.asarray(out), np.asarray(ref_mirror),
                               rtol=2e-3, atol=2e-3)

    # Loose check vs the full-f32 PyTorch-semantics reference (bf16 weight storage
    # is the only deviation).
    ref_f32 = reference_forward_f32(q, raw, n_joints=n_joints, n_points=n_points)
    np.testing.assert_allclose(np.asarray(out), np.asarray(ref_f32),
                               rtol=0.1, atol=0.1)

    print("KERNEL_OK")
</pallas_src>

<mosaic_0001>
module attributes {stable_mosaic.version = 11 : i64} {
  func.func @gripper_decoder_kernel(%arg0: i32, %arg1: memref<8x1xf32, #tpu.memory_space<vmem>>, %arg2: memref<1x512xf32, #tpu.memory_space<vmem>>, %arg3: memref<1x512xf32, #tpu.memory_space<vmem>>, %arg4: memref<1x512xf32, #tpu.memory_space<vmem>>, %arg5: memref<512x512xbf16, #tpu.memory_space<vmem>>, %arg6: memref<1x512xf32, #tpu.memory_space<vmem>>, %arg7: memref<8x512xf32, #tpu.memory_space<vmem>>) attributes {dimension_semantics = [#tpu.dimension_semantics<parallel>], iteration_bounds = array<i64: 3>, scalar_prefetch = 0 : i64, scratch_operands = 0 : i64, tpu.core_type = #tpu.core_type<tc>, window_params = [{pipeline_mode = #tpu.pipeline_mode<synchronous>, transform_indices = @transform_0, window_bounds = array<i64: 8, 1>}, {pipeline_mode = #tpu.pipeline_mode<synchronous>, transform_indices = @transform_1, window_bounds = array<i64: 1, 512>}, {pipeline_mode = #tpu.pipeline_mode<synchronous>, transform_indices = @transform_2, window_bounds = array<i64: 1, 512>}, {transform_indices = @transform_3, window_bounds = array<i64: 1, 512>}, {transform_indices = @transform_4, window_bounds = array<i64: 512, 512>}, {transform_indices = @transform_5, window_bounds = array<i64: 1, 512>}, {transform_indices = @transform_6, window_bounds = array<i64: 8, 512>}]} {
    %c0 = arith.constant 0 : index
    %c0_0 = arith.constant 0 : index
    %0 = vector.load %arg3[%c0, %c0_0] : memref<1x512xf32, #tpu.memory_space<vmem>>, vector<1x512xf32>
    %c0_1 = arith.constant 0 : index
    %c0_2 = arith.constant 0 : index
    %1 = vector.load %arg1[%c0_1, %c0_2] : memref<8x1xf32, #tpu.memory_space<vmem>>, vector<8x1xf32>
    %c0_3 = arith.constant 0 : index
    %c0_4 = arith.constant 0 : index
    %2 = vector.load %arg2[%c0_3, %c0_4] : memref<1x512xf32, #tpu.memory_space<vmem>>, vector<1x512xf32>
    %3 = vector.broadcast %1 : vector<8x1xf32> to vector<8x512xf32>
    %4 = vector.broadcast %2 : vector<1x512xf32> to vector<8x512xf32>
    %5 = arith.mulf %3, %4 : vector<8x512xf32>
    %6 = vector.broadcast %0 : vector<1x512xf32> to vector<8x512xf32>
    %7 = arith.addf %6, %5 : vector<8x512xf32>
    %cst = arith.constant 0.000000e+00 : f32
    %8 = vector.broadcast %cst : f32 to vector<8x512xf32>
    %9 = arith.maximumf %7, %8 : vector<8x512xf32>
    %10 = arith.truncf %9 : vector<8x512xf32> to vector<8x512xbf16>
    %c0_5 = arith.constant 0 : index
    %c0_6 = arith.constant 0 : index
    %11 = vector.load %arg5[%c0_5, %c0_6] : memref<512x512xbf16, #tpu.memory_space<vmem>>, vector<512x512xbf16>
    %cst_7 = arith.constant dense<0.000000e+00> : vector<8x512xf32>
    %12 = tpu.matmul %10, %11, %cst_7 {dimension_numbers = #tpu.dot_dimension_numbers<[1], [0], [0], [1], [0, 0, 1, 1], [], []>} : vector<8x512xbf16>, vector<512x512xbf16>, vector<8x512xf32> -> vector<8x512xf32>
    %c0_8 = arith.constant 0 : index
    %c0_9 = arith.constant 0 : index
    %13 = vector.load %arg6[%c0_8, %c0_9] : memref<1x512xf32, #tpu.memory_space<vmem>>, vector<1x512xf32>
    %14 = vector.broadcast %13 : vector<1x512xf32> to vector<8x512xf32>
    %15 = arith.addf %12, %14 : vector<8x512xf32>
    %c0_10 = arith.constant 0 : index
    %c0_11 = arith.constant 0 : index
    %16 = vector.load %arg1[%c0_10, %c0_11] : memref<8x1xf32, #tpu.memory_space<vmem>>, vector<8x1xf32>
    %c0_12 = arith.constant 0 : index
    %c0_13 = arith.constant 0 : index
    %17 = vector.load %arg4[%c0_12, %c0_13] : memref<1x512xf32, #tpu.memory_space<vmem>>, vector<1x512xf32>
    %18 = vector.broadcast %16 : vector<8x1xf32> to vector<8x512xf32>
    %19 = vector.broadcast %17 : vector<1x512xf32> to vector<8x512xf32>
    %20 = arith.mulf %18, %19 : vector<8x512xf32>
    %21 = arith.addf %15, %20 : vector<8x512xf32>
    %c0_14 = arith.constant 0 : index
    %c0_15 = arith.constant 0 : index
    %22 = vector.load %arg7[%c0_14, %c0_15] : memref<8x512xf32, #tpu.memory_space<vmem>>, vector<8x512xf32>
    tpu.vector_store %arg7[%c0_14, %c0_15], %21 {strides = array<i32>} : memref<8x512xf32, #tpu.memory_space<vmem>>, vector<8x512xf32>,
    return
  }
  func.func @transform_0(%arg0: i32) -> (i32, i32) {
    %c0_i32 = arith.constant 0 : i32
    %c0_i32_0 = arith.constant 0 : i32
    %c0_i32_1 = arith.constant 0 : i32
    return %c0_i32, %c0_i32_0 : i32, i32
  }
  func.func @transform_1(%arg0: i32) -> (i32, i32) {
    %c0_i32 = arith.constant 0 : i32
    %c0_i32_0 = arith.constant 0 : i32
    %c0_i32_1 = arith.constant 0 : i32
    return %c0_i32, %c0_i32_0 : i32, i32
  }
  func.func @transform_2(%arg0: i32) -> (i32, i32) {
    %c0_i32 = arith.constant 0 : i32
    %c0_i32_0 = arith.constant 0 : i32
    %c0_i32_1 = arith.constant 0 : i32
    return %c0_i32, %c0_i32_0 : i32, i32
  }
  func.func @transform_3(%arg0: i32) -> (i32, i32) {
    %c0_i32 = arith.constant 0 : i32
    %c0_i32_0 = arith.constant 0 : i32
    return %c0_i32, %arg0 : i32, i32
  }
  func.func @transform_4(%arg0: i32) -> (i32, i32) {
    %c0_i32 = arith.constant 0 : i32
    %c0_i32_0 = arith.constant 0 : i32
    return %c0_i32, %arg0 : i32, i32
  }
  func.func @transform_5(%arg0: i32) -> (i32, i32) {
    %c0_i32 = arith.constant 0 : i32
    %c0_i32_0 = arith.constant 0 : i32
    return %c0_i32, %arg0 : i32, i32
  }
  func.func @transform_6(%arg0: i32) -> (i32, i32) {
    %c0_i32 = arith.constant 0 : i32
    %c0_i32_0 = arith.constant 0 : i32
    return %c0_i32, %arg0 : i32, i32
  }
}

</mosaic_0001>

<llo_original>
// kernel: tpu_custom_call.1
$region0: #{tpu_custom_call.1}
  #allocation0 [shape = 'u32[]', space=smem, size = 0x4, offset = 0x4, fixed_abs, tag = 'smem constant byte address 0x4 - core index']
  #allocation1 [shape = 'u32[144,128]{1,0:T(1,128)}', space=vmem, size = 0x12000, scoped, tag = 'internal scratch']
  %s0 = inlined_call_operand.vmem [shape: f32[8,1], index: 0, kind: input, shape index: {}]
  %s1 = inlined_call_operand.hbm [shape: f32[1,512], index: 1, kind: input, shape index: {}]
  %s2 = inlined_call_operand.hbm [shape: f32[1,512], index: 2, kind: input, shape index: {}]
  %s3 = inlined_call_operand.hbm [shape: f32[1,1536], index: 3, kind: input, shape index: {}]
  %s4 = inlined_call_operand.hbm [shape: bf16[512,1536], index: 4, kind: input, shape index: {}]
  %s5 = inlined_call_operand.hbm [shape: f32[1,1536], index: 5, kind: input, shape index: {}]
  %s6 = inlined_call_operand.hbm [shape: f32[8,1536], index: 6, kind: output, shape index: {}]
  %s7 = sld [smem:[#allocation0]]
  $region77: #{tpu_custom_call.1} parent=0
    _
  %s9 = ssub.s32 1, %s7
  %s10 = scalar_select 0, %s9, %s7
  $region1: #{tpu_custom_call.1} parent=0
    #allocation2 [shape = 'u8[2048]{0}', space=vmem, size = 0x800, scoped, tag = 'input window, operand 1, single buffered']
    #allocation3 [shape = 's32[2]{0}', space=sflag, size = 0x8, scoped, tag = 'scoped memory for tpu_custom_call.1']
    #allocation4 [shape = 's32[2]{0}', space=sflag, size = 0x8, scoped, tag = 'scoped memory for tpu_custom_call.1']
    #allocation5 [shape = 'u8[2048]{0}', space=vmem, size = 0x800, scoped, tag = 'input window, operand 2, single buffered']
    #allocation6 [shape = 's32[1]{0}', space=sflag, size = 0x4, scoped, tag = 'scoped memory for tpu_custom_call.1']
    #allocation7 [shape = 'u8[4096]{0}', space=vmem, size = 0x1000, scoped, tag = 'input window, operand 3']
    #allocation8 [shape = 'u8[1048576]{0}', space=vmem, size = 0x100000, scoped, tag = 'input window, operand 4']
    #allocation9 [shape = 'u8[4096]{0}', space=vmem, size = 0x1000, scoped, tag = 'input window, operand 5']
    #allocation10 [shape = 'u8[32768]{0}', space=vmem, size = 0x8000, scoped, tag = 'output window, operand 0']
    %11 = vsyncpa [#allocation3], 0
    %12 = vsyncpa [#allocation6], 0
    %13 = vsyncpa [#allocation4], 0
    %s14 = scalar_lea.sflag [#allocation4], 1
    %15 = vsyncpa %s14, 0
    loop: start=0, step=1, limit=5
    $region2: #{tpu_custom_call.1} parent=1 // loop_pre_header
      _
    $region3: #{tpu_custom_call.1} parent=1 // loop_header
      %s17 = sphi 0, %s21
      %p18 = scmp.ge.s32.totalorder %s17, 5
      %s25 = sphi 0, %s25
      %s27 = sphi 0, %s25
      %s28 = sphi 0, %s27
      %s42 = sphi 0, %s28
      %s46 = sphi 0, %s46
      %s48 = sphi 0, %s46
      %s49 = sphi 0, %s48
      %s63 = sphi 0, %s49
      %s67 = sphi 0, %s67
      %s69 = sphi 0, %s67
      %s70 = sphi 0, %s69
      %s84 = sphi 0, %s70
      %s90 = sphi 0, %s92
      %s93 = sphi 0, %s90
      %s94 = sphi 0, %s93
      %s110 = sphi 0, %s94
      %s116 = sphi 0, %s118
      %s119 = sphi 0, %s116
      %s120 = sphi 0, %s119
      %s136 = sphi 0, %s120
      %s142 = sphi 0, %s144
      %s145 = sphi 0, %s142
      %s146 = sphi 0, %s145
      %s162 = sphi 0, %s146
      %s168 = sphi 0, %s170
      %s171 = sphi 0, %s168
      %s172 = sphi 0, %s171
      %s188 = sphi 0, %s172
    $region4: #{tpu_custom_call.1} parent=1 // loop_header_branch
      %20 = sbr.rel (%p18) target = $region8
    $region5: #{tpu_custom_call.1} parent=1 // loop_body
      %s22 = ssub.s32 %s17, 1
      %s23 = ssub.s32 %s17, 2
      %s24 = sadd.s32 %s17, 1
      %s26 = sadd.s32 %s25, 1
      %p29 = scmp.eq.s32.totalorder %s17, 2
      %p30 = scmp.ne.s32.totalorder %s25, %s27
      %p31 = scmp.eq.s32.totalorder %s17, 0
      %p32 = por %p30, %p31
      %p33 = scmp.ne.s32.totalorder %s25, %s27
      %p34 = scmp.eq.s32.totalorder %s22, 2
      %p35 = por %p33, %p34
      %p36 = scmp.ne.s32.totalorder %s27, %s28
      %p37 = scmp.eq.s32.totalorder %s22, 0
      %p38 = por %p36, %p37
      %p39 = scmp.ne.s32.totalorder %s27, %s28
      %p40 = scmp.eq.s32.totalorder %s23, 2
      %p41 = por %p39, %p40
      %p43 = scmp.ne.s32.totalorder %s28, %s42
      %p44 = scmp.eq.s32.totalorder %s23, 0
      %p45 = por %p43, %p44
      %s47 = sadd.s32 %s46, 1
      %p50 = scmp.eq.s32.totalorder %s17, 2
      %p51 = scmp.ne.s32.totalorder %s46, %s48
      %p52 = scmp.eq.s32.totalorder %s17, 0
      %p53 = por %p51, %p52
      %p54 = scmp.ne.s32.totalorder %s46, %s48
      %p55 = scmp.eq.s32.totalorder %s22, 2
      %p56 = por %p54, %p55
      %p57 = scmp.ne.s32.totalorder %s48, %s49
      %p58 = scmp.eq.s32.totalorder %s22, 0
      %p59 = por %p57, %p58
      %p60 = scmp.ne.s32.totalorder %s48, %s49
      %p61 = scmp.eq.s32.totalorder %s23, 2
      %p62 = por %p60, %p61
      %p64 = scmp.ne.s32.totalorder %s49, %s63
      %p65 = scmp.eq.s32.totalorder %s23, 0
      %p66 = por %p64, %p65
      %s68 = sadd.s32 %s67, 1
      %p71 = scmp.eq.s32.totalorder %s17, 2
      %p72 = scmp.ne.s32.totalorder %s67, %s69
      %p73 = scmp.eq.s32.totalorder %s17, 0
      %p74 = por %p72, %p73
      %p75 = scmp.ne.s32.totalorder %s67, %s69
      %p76 = scmp.eq.s32.totalorder %s22, 2
      %p77 = por %p75, %p76
      %p78 = scmp.ne.s32.totalorder %s69, %s70
      %p79 = scmp.eq.s32.totalorder %s22, 0
      %p80 = por %p78, %p79
      %p81 = scmp.ne.s32.totalorder %s69, %s70
      %p82 = scmp.eq.s32.totalorder %s23, 2
      %p83 = por %p81, %p82
      %p85 = scmp.ne.s32.totalorder %s70, %s84
      %p86 = scmp.eq.s32.totalorder %s23, 0
      %p87 = por %p85, %p86
      %s88 = ssub.s32 %s17, %s24
      %p89 = scmp.eq.s32.totalorder %s88, 0
      %s91 = sadd.s32 %s90, 1
      %s92 = scalar_select %p89, %s90, %s91
      %p95 = pneg %p89
      %p96 = scmp.eq.s32.totalorder %s17, 2
      %p97 = por %p95, %p96
      %p98 = scmp.ne.s32.totalorder %s90, %s93
      %p99 = scmp.eq.s32.totalorder %s17, 0
      %p100 = por %p98, %p99
      %p101 = scmp.ne.s32.totalorder %s90, %s93
      %p102 = scmp.eq.s32.totalorder %s22, 2
      %p103 = por %p101, %p102
      %p104 = scmp.ne.s32.totalorder %s93, %s94
      %p105 = scmp.eq.s32.totalorder %s22, 0
      %p106 = por %p104, %p105
      %p107 = scmp.ne.s32.totalorder %s93, %s94
      %p108 = scmp.eq.s32.totalorder %s23, 2
      %p109 = por %p107, %p108
      %p111 = scmp.ne.s32.totalorder %s94, %s110
      %p112 = scmp.eq.s32.totalorder %s23, 0
      %p113 = por %p111, %p112
      %s114 = ssub.s32 %s17, %s24
      %p115 = scmp.eq.s32.totalorder %s114, 0
      %s117 = sadd.s32 %s116, 1
      %s118 = scalar_select %p115, %s116, %s117
      %p121 = pneg %p115
      %p122 = scmp.eq.s32.totalorder %s17, 2
      %p123 = por %p121, %p122
      %p124 = scmp.ne.s32.totalorder %s116, %s119
      %p125 = scmp.eq.s32.totalorder %s17, 0
      %p126 = por %p124, %p125
      %p127 = scmp.ne.s32.totalorder %s116, %s119
      %p128 = scmp.eq.s32.totalorder %s22, 2
      %p129 = por %p127, %p128
      %p130 = scmp.ne.s32.totalorder %s119, %s120
      %p131 = scmp.eq.s32.totalorder %s22, 0
      %p132 = por %p130, %p131
      %p133 = scmp.ne.s32.totalorder %s119, %s120
      %p134 = scmp.eq.s32.totalorder %s23, 2
      %p135 = por %p133, %p134
      %p137 = scmp.ne.s32.totalorder %s120, %s136
      %p138 = scmp.eq.s32.totalorder %s23, 0
      %p139 = por %p137, %p138
      %s140 = ssub.s32 %s17, %s24
      %p141 = scmp.eq.s32.totalorder %s140, 0
      %s143 = sadd.s32 %s142, 1
      %s144 = scalar_select %p141, %s142, %s143
      %p147 = pneg %p141
      %p148 = scmp.eq.s32.totalorder %s17, 2
      %p149 = por %p147, %p148
      %p150 = scmp.ne.s32.totalorder %s142, %s145
      %p151 = scmp.eq.s32.totalorder %s17, 0
      %p152 = por %p150, %p151
      %p153 = scmp.ne.s32.totalorder %s142, %s145
      %p154 = scmp.eq.s32.totalorder %s22, 2
      %p155 = por %p153, %p154
      %p156 = scmp.ne.s32.totalorder %s145, %s146
      %p157 = scmp.eq.s32.totalorder %s22, 0
      %p158 = por %p156, %p157
      %p159 = scmp.ne.s32.totalorder %s145, %s146
      %p160 = scmp.eq.s32.totalorder %s23, 2
      %p161 = por %p159, %p160
      %p163 = scmp.ne.s32.totalorder %s146, %s162
      %p164 = scmp.eq.s32.totalorder %s23, 0
      %p165 = por %p163, %p164
      %s166 = ssub.s32 %s17, %s24
      %p167 = scmp.eq.s32.totalorder %s166, 0
      %s169 = sadd.s32 %s168, 1
      %s170 = scalar_select %p167, %s168, %s169
      %p173 = pneg %p167
      %p174 = scmp.eq.s32.totalorder %s17, 2
      %p175 = por %p173, %p174
      %p176 = scmp.ne.s32.totalorder %s168, %s171
      %p177 = scmp.eq.s32.totalorder %s17, 0
      %p178 = por %p176, %p177
      %p179 = scmp.ne.s32.totalorder %s168, %s171
      %p180 = scmp.eq.s32.totalorder %s22, 2
      %p181 = por %p179, %p180
      %p182 = scmp.ne.s32.totalorder %s171, %s172
      %p183 = scmp.eq.s32.totalorder %s22, 0
      %p184 = por %p182, %p183
      %p185 = scmp.ne.s32.totalorder %s171, %s172
      %p186 = scmp.eq.s32.totalorder %s23, 2
      %p187 = por %p185, %p186
      %p189 = scmp.ne.s32.totalorder %s172, %s188
      %p190 = scmp.eq.s32.totalorder %s23, 0
      %p191 = por %p189, %p190
      %p192 = scmp.le.s32.totalorder 1, %s17
      %p193 = scmp.lt.s32.totalorder %s17, 4
      %p194 = pnand %p192, %p193
      %p195 = pneg %p194
      // Predicated region
      $region9: #{tpu_custom_call.1} parent=5 // pred_check
        _
      $region10: #{tpu_custom_call.1} parent=5 // pred_check_branch
        %197 = sbr.rel (%p194) target = $region12
      $region11: #{tpu_custom_call.1} parent=5 // pred_region
        %s198 = ssub.s32 %s17, 1
        // Predicated region
        $region13: #{tpu_custom_call.1} parent=11 // pred_check
          %p199 = pneg %p38
        $region14: #{tpu_custom_call.1} parent=11 // pred_check_branch
          %201 = sbr.rel (%p199) target = $region16
        $region15: #{tpu_custom_call.1} parent=11 // pred_region
          _
        $region16: #{tpu_custom_call.1} parent=11 // pred_fallthru
          _
        // Predicated region
        $region17: #{tpu_custom_call.1} parent=11 // pred_check
          %p202 = pneg %p59
        $region18: #{tpu_custom_call.1} parent=11 // pred_check_branch
          %204 = sbr.rel (%p202) target = $region20
        $region19: #{tpu_custom_call.1} parent=11 // pred_region
          %s206 = ssub.s32 64, 64
          %207 = vsyncadd [#allocation3], %s206
          %s209 = sshll.u32 [#allocation2], 4
          %s210 = int_to_ptr.vmem [resolvable:$true] %s209
          %212 = dma.hbm_to_vmem [thread:$0]  %s1, 64, %s210, [#allocation3]
        $region20: #{tpu_custom_call.1} parent=11 // pred_fallthru
          _
        // Predicated region
        $region21: #{tpu_custom_call.1} parent=11 // pred_check
          %p213 = pneg %p80
        $region22: #{tpu_custom_call.1} parent=11 // pred_check_branch
          %215 = sbr.rel (%p213) target = $region24
        $region23: #{tpu_custom_call.1} parent=11 // pred_region
          %s217 = ssub.s32 64, 64
          %218 = vsyncadd [#allocation6], %s217
          %s220 = sshll.u32 [#allocation5], 4
          %s221 = int_to_ptr.vmem [resolvable:$true] %s220
          %223 = dma.hbm_to_vmem [thread:$0]  %s2, 64, %s221, [#allocation6]
        $region24: #{tpu_custom_call.1} parent=11 // pred_fallthru
          _
      $region12: #{tpu_custom_call.1} parent=5 // pred_fallthru
        _
      %p224 = scmp.lt.s32.totalorder %s17, 3
      // Predicated region
      $region25: #{tpu_custom_call.1} parent=5 // pred_check
        %p225 = pneg %p224
      $region26: #{tpu_custom_call.1} parent=5 // pred_check_branch
        %227 = sbr.rel (%p225) target = $region28
      $region27: #{tpu_custom_call.1} parent=5 // pred_region
        // Predicated region
        $region29: #{tpu_custom_call.1} parent=27 // pred_check
          %p228 = pneg %p100
        $region30: #{tpu_custom_call.1} parent=27 // pred_check_branch
          %230 = sbr.rel (%p228) target = $region32
        $region31: #{tpu_custom_call.1} parent=27 // pred_region
          %s231 = sand.u32 %s17, 1
          %s232 = scalar_lea.sflag [#allocation3], %s231
          %s233 = sand.u32 %s90, 1
          %s234 = smul.addr %s233, 4
          %s235 = scalar_lea.vmem [#allocation7], %s234
          %s236 = smul.u32 4, %s17
          %s238 = ssub.s32 64, 64
          %239 = vsyncadd %s232, %s238
          %s240 = smul.addr %s236, 16
          %s241 = scalar_lea.hbm %s3, %s240
          %s243 = sshll.u32 %s235, 4
          %s244 = int_to_ptr.vmem [resolvable:$true] %s243
          %246 = dma.hbm_to_vmem [thread:$0]  %s241, 64, %s244, %s232
        $region32: #{tpu_custom_call.1} parent=27 // pred_fallthru
          _
        // Predicated region
        $region33: #{tpu_custom_call.1} parent=27 // pred_check
          %p247 = pneg %p126
        $region34: #{tpu_custom_call.1} parent=27 // pred_check_branch
          %249 = sbr.rel (%p247) target = $region36
        $region35: #{tpu_custom_call.1} parent=27 // pred_region
          %s250 = sand.u32 %s17, 1
          %s251 = scalar_lea.sflag [#allocation3], %s250
          %s252 = sand.u32 %s116, 1
          %s253 = smul.addr %s252, 1024
          %s254 = scalar_lea.vmem [#allocation8], %s253
          %s255 = smul.u32 4, %s17
          %s257 = ssub.s32 16384, 16384
          %258 = vsyncadd %s251, %s257
          %s259 = smul.addr %s255, 64
          %s260 = scalar_lea.hbm %s4, %s259
          %s261 = sshll.u32 %s254, 4
          %s262 = int_to_ptr.vmem [resolvable:$true] %s261
          %267 = dma.hbm_to_vmem [thread:$0]  %s260, 16384, %s262, %s251, 768, 256, 16
        $region36: #{tpu_custom_call.1} parent=27 // pred_fallthru
          _
        // Predicated region
        $region37: #{tpu_custom_call.1} parent=27 // pred_check
          %p268 = pneg %p152
        $region38: #{tpu_custom_call.1} parent=27 // pred_check_branch
          %270 = sbr.rel (%p268) target = $region40
        $region39: #{tpu_custom_call.1} parent=27 // pred_region
          %s271 = sand.u32 %s17, 1
          %s272 = scalar_lea.sflag [#allocation3], %s271
          %s273 = sand.u32 %s142, 1
          %s274 = smul.addr %s273, 4
          %s275 = scalar_lea.vmem [#allocation9], %s274
          %s276 = smul.u32 4, %s17
          %s278 = ssub.s32 64, 64
          %279 = vsyncadd %s272, %s278
          %s280 = smul.addr %s276, 16
          %s281 = scalar_lea.hbm %s5, %s280
          %s283 = sshll.u32 %s275, 4
          %s284 = int_to_ptr.vmem [resolvable:$true] %s283
          %286 = dma.hbm_to_vmem [thread:$0]  %s281, 64, %s284, %s272
        $region40: #{tpu_custom_call.1} parent=27 // pred_fallthru
          _
      $region28: #{tpu_custom_call.1} parent=5 // pred_fallthru
        _
      %p287 = scmp.le.s32.totalorder 1, %s17
      %p288 = scmp.lt.s32.totalorder %s17, 4
      %p289 = pnand %p287, %p288
      %p290 = pneg %p289
      // Predicated region
      $region41: #{tpu_custom_call.1} parent=5 // pred_check
        _
      $region42: #{tpu_custom_call.1} parent=5 // pred_check_branch
        %292 = sbr.rel (%p289) target = $region44
      $region43: #{tpu_custom_call.1} parent=5 // pred_region
        %s293 = ssub.s32 %s17, 1
        // Predicated region
        $region45: #{tpu_custom_call.1} parent=43 // pred_check
          %p294 = pneg %p59
        $region46: #{tpu_custom_call.1} parent=43 // pred_check_branch
          %296 = sbr.rel (%p294) target = $region48
        $region47: #{tpu_custom_call.1} parent=43 // pred_region
          %297 = dma.done [#allocation3], 64
        $region48: #{tpu_custom_call.1} parent=43 // pred_fallthru
          _
        // Predicated region
        $region49: #{tpu_custom_call.1} parent=43 // pred_check
          %p298 = pneg %p80
        $region50: #{tpu_custom_call.1} parent=43 // pred_check_branch
          %300 = sbr.rel (%p298) target = $region52
        $region51: #{tpu_custom_call.1} parent=43 // pred_region
          %301 = dma.done [#allocation6], 64
        $region52: #{tpu_custom_call.1} parent=43 // pred_fallthru
          _
        %s302 = sand.u32 %s22, 1
        %s303 = scalar_lea.sflag [#allocation3], %s302
        %s304 = sand.u32 %s93, 1
        %s305 = smul.addr %s304, 4
        %s306 = scalar_lea.vmem [#allocation7], %s305
        // Predicated region
        $region53: #{tpu_custom_call.1} parent=43 // pred_check
          %p307 = pneg %p106
        $region54: #{tpu_custom_call.1} parent=43 // pred_check_branch
          %309 = sbr.rel (%p307) target = $region56
        $region55: #{tpu_custom_call.1} parent=43 // pred_region
          %310 = dma.done %s303, 64
        $region56: #{tpu_custom_call.1} parent=43 // pred_fallthru
          _
        %s311 = sand.u32 %s22, 1
        %s312 = scalar_lea.sflag [#allocation3], %s311
        %s313 = sand.u32 %s119, 1
        %s314 = smul.addr %s313, 1024
        %s315 = scalar_lea.vmem [#allocation8], %s314
        // Predicated region
        $region57: #{tpu_custom_call.1} parent=43 // pred_check
          %p316 = pneg %p132
        $region58: #{tpu_custom_call.1} parent=43 // pred_check_branch
          %318 = sbr.rel (%p316) target = $region60
        $region59: #{tpu_custom_call.1} parent=43 // pred_region
          %319 = dma.done %s312, 16384
        $region60: #{tpu_custom_call.1} parent=43 // pred_fallthru
          _
        %s320 = sand.u32 %s22, 1
        %s321 = scalar_lea.sflag [#allocation3], %s320
        %s322 = sand.u32 %s145, 1
        %s323 = smul.addr %s322, 4
        %s324 = scalar_lea.vmem [#allocation9], %s323
        // Predicated region
        $region61: #{tpu_custom_call.1} parent=43 // pred_check
          %p325 = pneg %p158
        $region62: #{tpu_custom_call.1} parent=43 // pred_check_branch
          %327 = sbr.rel (%p325) target = $region64
        $region63: #{tpu_custom_call.1} parent=43 // pred_region
          %328 = dma.done %s321, 64
        $region64: #{tpu_custom_call.1} parent=43 // pred_fallthru
          _
        %p329 = pneg %p38
        %p330 = pneg %p35
        %p331 = pneg %p59
        %p332 = pneg %p56
        %p333 = pneg %p80
        %p334 = pneg %p77
        %s335 = sand.u32 %s22, 1
        %s336 = scalar_lea.sflag [#allocation3], %s335
        %s337 = sand.u32 %s93, 1
        %s338 = smul.addr %s337, 4
        %s339 = scalar_lea.vmem [#allocation7], %s338
        %p340 = pneg %p106
        %p341 = pneg %p103
        %s342 = sand.u32 %s22, 1
        %s343 = scalar_lea.sflag [#allocation3], %s342
        %s344 = sand.u32 %s119, 1
        %s345 = smul.addr %s344, 1024
        %s346 = scalar_lea.vmem [#allocation8], %s345
        %p347 = pneg %p132
        %p348 = pneg %p129
        %s349 = sand.u32 %s22, 1
        %s350 = scalar_lea.sflag [#allocation3], %s349
        %s351 = sand.u32 %s145, 1
        %s352 = smul.addr %s351, 4
        %s353 = scalar_lea.vmem [#allocation9], %s352
        %p354 = pneg %p158
        %p355 = pneg %p155
        %p356 = pneg %p184
        %p357 = pneg %p181
        %s358 = sand.u32 %s171, 1
        %s359 = scalar_lea.sflag [#allocation4], %s358
        %s360 = sand.u32 %s171, 1
        %s361 = smul.addr %s360, 32
        %s362 = scalar_lea.vmem [#allocation10], %s361
        %s363 = smul.u32 4, %s22
        %s364 = smul.u32 4, %s22
        %s365 = smul.u32 4, %s22
        %s366 = smul.u32 4, %s22
        %v367 = vld [vmem:[#allocation5] sm:$0xf]
        %v368 = vld [vmem:[%s0] sm:$0xff]
        %v369 = vld [vmem:[#allocation2] sm:$0xf]
        %371 = vset.pattern.permute.xlu0 0
        %372 = vperm.xlu0 %371, %v368
        %v373 = vpop.permute.xlu0 %372
        %v376 = vlaneseq
        %v377 = vshrl.u32 %v376, 7
        %v378 = vsub.s32 0, %v377
        %v379 = vrot.slane %v369, %v378
        %v380 = vlaneseq
        %v381 = vshrl.u32 %v380, 7
        %v382 = vsub.s32 1, %v381
        %v383 = vrot.slane %v369, %v382
        %v384 = vlaneseq
        %v385 = vshrl.u32 %v384, 7
        %v386 = vsub.s32 2, %v385
        %v387 = vrot.slane %v369, %v386
        %v388 = vlaneseq
        %v389 = vshrl.u32 %v388, 7
        %v390 = vsub.s32 3, %v389
        %v391 = vrot.slane %v369, %v390
        %v396 = vmul.f32 %v373, %v379
        %v397 = vmul.f32 %v373, %v383
        %v398 = vmul.f32 %v373, %v387
        %v399 = vmul.f32 %v373, %v391
        %v401 = vlaneseq
        %v402 = vshrl.u32 %v401, 7
        %v403 = vsub.s32 0, %v402
        %v404 = vrot.slane %v367, %v403
        %v405 = vlaneseq
        %v406 = vshrl.u32 %v405, 7
        %v407 = vsub.s32 1, %v406
        %v408 = vrot.slane %v367, %v407
        %v409 = vlaneseq
        %v410 = vshrl.u32 %v409, 7
        %v411 = vsub.s32 2, %v410
        %v412 = vrot.slane %v367, %v411
        %v413 = vlaneseq
        %v414 = vshrl.u32 %v413, 7
        %v415 = vsub.s32 3, %v414
        %v416 = vrot.slane %v367, %v415
        %v421 = vadd.f32 %v404, %v396
        %v422 = vadd.f32 %v408, %v397
        %v423 = vadd.f32 %v412, %v398
        %v424 = vadd.f32 %v416, %v399
        %v425 = vmax.f32 %v421, 0.0
        %v426 = vmax.f32 %v422, 0.0
        %v427 = vmax.f32 %v423, 0.0
        %v428 = vmax.f32 %v424, 0.0
        %v429 = vpack.c.bf16 %v425, %v425
        %v430 = vpack.c.bf16 %v426, %v426
        %v431 = vpack.c.bf16 %v427, %v427
        %v432 = vpack.c.bf16 %v428, %v428
        %v433 = vld [vmem:[%s315] sm:$0xff]
        %v434 = vld [vmem:[%s315 + $0x8] sm:$0xff]
        %v435 = vld [vmem:[%s315 + $0x10] sm:$0xff]
        %v436 = vld [vmem:[%s315 + $0x18] sm:$0xff]
        %v437 = vld [vmem:[%s315 + $0x20] sm:$0xff]
        %v438 = vld [vmem:[%s315 + $0x28] sm:$0xff]
        %v439 = vld [vmem:[%s315 + $0x30] sm:$0xff]
        %v440 = vld [vmem:[%s315 + $0x38] sm:$0xff]
        %v441 = vld [vmem:[%s315 + $0x40] sm:$0xff]
        %v442 = vld [vmem:[%s315 + $0x48] sm:$0xff]
        %v443 = vld [vmem:[%s315 + $0x50] sm:$0xff]
        %v444 = vld [vmem:[%s315 + $0x58] sm:$0xff]
        %v445 = vld [vmem:[%s315 + $0x60] sm:$0xff]
        %v446 = vld [vmem:[%s315 + $0x68] sm:$0xff]
        %v447 = vld [vmem:[%s315 + $0x70] sm:$0xff]
        %v448 = vld [vmem:[%s315 + $0x78] sm:$0xff]
        %v449 = vld [vmem:[%s315 + $0x80] sm:$0xff]
        %v450 = vld [vmem:[%s315 + $0x88] sm:$0xff]
        %v451 = vld [vmem:[%s315 + $0x90] sm:$0xff]
        %v452 = vld [vmem:[%s315 + $0x98] sm:$0xff]
        %v453 = vld [vmem:[%s315 + $0xa0] sm:$0xff]
        %v454 = vld [vmem:[%s315 + $0xa8] sm:$0xff]
        %v455 = vld [vmem:[%s315 + $0xb0] sm:$0xff]
        %v456 = vld [vmem:[%s315 + $0xb8] sm:$0xff]
        %v457 = vld [vmem:[%s315 + $0xc0] sm:$0xff]
        %v458 = vld [vmem:[%s315 + $0xc8] sm:$0xff]
        %v459 = vld [vmem:[%s315 + $0xd0] sm:$0xff]
        %v460 = vld [vmem:[%s315 + $0xd8] sm:$0xff]
        %v461 = vld [vmem:[%s315 + $0xe0] sm:$0xff]
        %v462 = vld [vmem:[%s315 + $0xe8] sm:$0xff]
        %v463 = vld [vmem:[%s315 + $0xf0] sm:$0xff]
        %v464 = vld [vmem:[%s315 + $0xf8] sm:$0xff]
        %v465 = vld [vmem:[%s315 + $0x100] sm:$0xff]
        %v466 = vld [vmem:[%s315 + $0x108] sm:$0xff]
        %v467 = vld [vmem:[%s315 + $0x110] sm:$0xff]
        %v468 = vld [vmem:[%s315 + $0x118] sm:$0xff]
        %v469 = vld [vmem:[%s315 + $0x120] sm:$0xff]
        %v470 = vld [vmem:[%s315 + $0x128] sm:$0xff]
        %v471 = vld [vmem:[%s315 + $0x130] sm:$0xff]
        %v472 = vld [vmem:[%s315 + $0x138] sm:$0xff]
        %v473 = vld [vmem:[%s315 + $0x140] sm:$0xff]
        %v474 = vld [vmem:[%s315 + $0x148] sm:$0xff]
        %v475 = vld [vmem:[%s315 + $0x150] sm:$0xff]
        %v476 = vld [vmem:[%s315 + $0x158] sm:$0xff]
        %v477 = vld [vmem:[%s315 + $0x160] sm:$0xff]
        %v478 = vld [vmem:[%s315 + $0x168] sm:$0xff]
        %v479 = vld [vmem:[%s315 + $0x170] sm:$0xff]
        %v480 = vld [vmem:[%s315 + $0x178] sm:$0xff]
        %v481 = vld [vmem:[%s315 + $0x180] sm:$0xff]
        %v482 = vld [vmem:[%s315 + $0x188] sm:$0xff]
        %v483 = vld [vmem:[%s315 + $0x190] sm:$0xff]
        %v484 = vld [vmem:[%s315 + $0x198] sm:$0xff]
        %v485 = vld [vmem:[%s315 + $0x1a0] sm:$0xff]
        %v486 = vld [vmem:[%s315 + $0x1a8] sm:$0xff]
        %v487 = vld [vmem:[%s315 + $0x1b0] sm:$0xff]
        %v488 = vld [vmem:[%s315 + $0x1b8] sm:$0xff]
        %v489 = vld [vmem:[%s315 + $0x1c0] sm:$0xff]
        %v490 = vld [vmem:[%s315 + $0x1c8] sm:$0xff]
        %v491 = vld [vmem:[%s315 + $0x1d0] sm:$0xff]
        %v492 = vld [vmem:[%s315 + $0x1d8] sm:$0xff]
        %v493 = vld [vmem:[%s315 + $0x1e0] sm:$0xff]
        %v494 = vld [vmem:[%s315 + $0x1e8] sm:$0xff]
        %v495 = vld [vmem:[%s315 + $0x1f0] sm:$0xff]
        %v496 = vld [vmem:[%s315 + $0x1f8] sm:$0xff]
        %v497 = vld [vmem:[%s315 + $0x200] sm:$0xff]
        %v498 = vld [vmem:[%s315 + $0x208] sm:$0xff]
        %v499 = vld [vmem:[%s315 + $0x210] sm:$0xff]
        %v500 = vld [vmem:[%s315 + $0x218] sm:$0xff]
        %v501 = vld [vmem:[%s315 + $0x220] sm:$0xff]
        %v502 = vld [vmem:[%s315 + $0x228] sm:$0xff]
        %v503 = vld [vmem:[%s315 + $0x230] sm:$0xff]
        %v504 = vld [vmem:[%s315 + $0x238] sm:$0xff]
        %v505 = vld [vmem:[%s315 + $0x240] sm:$0xff]
        %v506 = vld [vmem:[%s315 + $0x248] sm:$0xff]
        %v507 = vld [vmem:[%s315 + $0x250] sm:$0xff]
        %v508 = vld [vmem:[%s315 + $0x258] sm:$0xff]
        %v509 = vld [vmem:[%s315 + $0x260] sm:$0xff]
        %v510 = vld [vmem:[%s315 + $0x268] sm:$0xff]
        %v511 = vld [vmem:[%s315 + $0x270] sm:$0xff]
        %v512 = vld [vmem:[%s315 + $0x278] sm:$0xff]
        %v513 = vld [vmem:[%s315 + $0x280] sm:$0xff]
        %v514 = vld [vmem:[%s315 + $0x288] sm:$0xff]
        %v515 = vld [vmem:[%s315 + $0x290] sm:$0xff]
        %v516 = vld [vmem:[%s315 + $0x298] sm:$0xff]
        %v517 = vld [vmem:[%s315 + $0x2a0] sm:$0xff]
        %v518 = vld [vmem:[%s315 + $0x2a8] sm:$0xff]
        %v519 = vld [vmem:[%s315 + $0x2b0] sm:$0xff]
        %v520 = vld [vmem:[%s315 + $0x2b8] sm:$0xff]
        %v521 = vld [vmem:[%s315 + $0x2c0] sm:$0xff]
        %v522 = vld [vmem:[%s315 + $0x2c8] sm:$0xff]
        %v523 = vld [vmem:[%s315 + $0x2d0] sm:$0xff]
        %v524 = vld [vmem:[%s315 + $0x2d8] sm:$0xff]
        %v525 = vld [vmem:[%s315 + $0x2e0] sm:$0xff]
        %v526 = vld [vmem:[%s315 + $0x2e8] sm:$0xff]
        %v527 = vld [vmem:[%s315 + $0x2f0] sm:$0xff]
        %v528 = vld [vmem:[%s315 + $0x2f8] sm:$0xff]
        %v529 = vld [vmem:[%s315 + $0x300] sm:$0xff]
        %v530 = vld [vmem:[%s315 + $0x308] sm:$0xff]
        %v531 = vld [vmem:[%s315 + $0x310] sm:$0xff]
        %v532 = vld [vmem:[%s315 + $0x318] sm:$0xff]
        %v533 = vld [vmem:[%s315 + $0x320] sm:$0xff]
        %v534 = vld [vmem:[%s315 + $0x328] sm:$0xff]
        %v535 = vld [vmem:[%s315 + $0x330] sm:$0xff]
        %v536 = vld [vmem:[%s315 + $0x338] sm:$0xff]
        %v537 = vld [vmem:[%s315 + $0x340] sm:$0xff]
        %v538 = vld [vmem:[%s315 + $0x348] sm:$0xff]
        %v539 = vld [vmem:[%s315 + $0x350] sm:$0xff]
        %v540 = vld [vmem:[%s315 + $0x358] sm:$0xff]
        %v541 = vld [vmem:[%s315 + $0x360] sm:$0xff]
        %v542 = vld [vmem:[%s315 + $0x368] sm:$0xff]
        %v543 = vld [vmem:[%s315 + $0x370] sm:$0xff]
        %v544 = vld [vmem:[%s315 + $0x378] sm:$0xff]
        %v545 = vld [vmem:[%s315 + $0x380] sm:$0xff]
        %v546 = vld [vmem:[%s315 + $0x388] sm:$0xff]
        %v547 = vld [vmem:[%s315 + $0x390] sm:$0xff]
        %v548 = vld [vmem:[%s315 + $0x398] sm:$0xff]
        %v549 = vld [vmem:[%s315 + $0x3a0] sm:$0xff]
        %v550 = vld [vmem:[%s315 + $0x3a8] sm:$0xff]
        %v551 = vld [vmem:[%s315 + $0x3b0] sm:$0xff]
        %v552 = vld [vmem:[%s315 + $0x3b8] sm:$0xff]
        %v553 = vld [vmem:[%s315 + $0x3c0] sm:$0xff]
        %v554 = vld [vmem:[%s315 + $0x3c8] sm:$0xff]
        %v555 = vld [vmem:[%s315 + $0x3d0] sm:$0xff]
        %v556 = vld [vmem:[%s315 + $0x3d8] sm:$0xff]
        %v557 = vld [vmem:[%s315 + $0x3e0] sm:$0xff]
        %v558 = vld [vmem:[%s315 + $0x3e8] sm:$0xff]
        %v559 = vld [vmem:[%s315 + $0x3f0] sm:$0xff]
        %v560 = vld [vmem:[%s315 + $0x3f8] sm:$0xff]
        %v561 = vld [vmem:[%s324] sm:$0xf]
        %v563 = vlaneseq
        %v564 = vshrl.u32 %v563, 7
        %v565 = vsub.s32 0, %v564
        %v566 = vrot.slane %v561, %v565
        %v567 = vlaneseq
        %v568 = vshrl.u32 %v567, 7
        %v569 = vsub.s32 1, %v568
        %v570 = vrot.slane %v561, %v569
        %v571 = vlaneseq
        %v572 = vshrl.u32 %v571, 7
        %v573 = vsub.s32 2, %v572
        %v574 = vrot.slane %v561, %v573
        %v575 = vlaneseq
        %v576 = vshrl.u32 %v575, 7
        %v577 = vsub.s32 3, %v576
        %v578 = vrot.slane %v561, %v577
        %v711 = vunpack.c.l.b16 %v433
        %v712 = vunpack.c.h.b16 %v433
        %v713 = vunpack.c.l.b16 %v434
        %v714 = vunpack.c.h.b16 %v434
        %v715 = vunpack.c.l.b16 %v435
        %v716 = vunpack.c.h.b16 %v435
        %v717 = vunpack.c.l.b16 %v436
        %v718 = vunpack.c.h.b16 %v436
        %v719 = vunpack.c.l.b16 %v437
        %v720 = vunpack.c.h.b16 %v437
        %v721 = vunpack.c.l.b16 %v438
        %v722 = vunpack.c.h.b16 %v438
        %v723 = vunpack.c.l.b16 %v439
        %v724 = vunpack.c.h.b16 %v439
        %v725 = vunpack.c.l.b16 %v440
        %v726 = vunpack.c.h.b16 %v440
        %v727 = vunpack.c.l.b16 %v441
        %v728 = vunpack.c.h.b16 %v441
        %v729 = vunpack.c.l.b16 %v442
        %v730 = vunpack.c.h.b16 %v442
        %v731 = vunpack.c.l.b16 %v443
        %v732 = vunpack.c.h.b16 %v443
        %v733 = vunpack.c.l.b16 %v444
        %v734 = vunpack.c.h.b16 %v444
        %v735 = vunpack.c.l.b16 %v445
        %v736 = vunpack.c.h.b16 %v445
        %v737 = vunpack.c.l.b16 %v446
        %v738 = vunpack.c.h.b16 %v446
        %v739 = vunpack.c.l.b16 %v447
        %v740 = vunpack.c.h.b16 %v447
        %v741 = vunpack.c.l.b16 %v448
        %v742 = vunpack.c.h.b16 %v448
        %v743 = vunpack.c.l.b16 %v449
        %v744 = vunpack.c.h.b16 %v449
        %v745 = vunpack.c.l.b16 %v450
        %v746 = vunpack.c.h.b16 %v450
        %v747 = vunpack.c.l.b16 %v451
        %v748 = vunpack.c.h.b16 %v451
        %v749 = vunpack.c.l.b16 %v452
        %v750 = vunpack.c.h.b16 %v452
        %v751 = vunpack.c.l.b16 %v453
        %v752 = vunpack.c.h.b16 %v453
        %v753 = vunpack.c.l.b16 %v454
        %v754 = vunpack.c.h.b16 %v454
        %v755 = vunpack.c.l.b16 %v455
        %v756 = vunpack.c.h.b16 %v455
        %v757 = vunpack.c.l.b16 %v456
        %v758 = vunpack.c.h.b16 %v456
        %v759 = vunpack.c.l.b16 %v457
        %v760 = vunpack.c.h.b16 %v457
        %v761 = vunpack.c.l.b16 %v458
        %v762 = vunpack.c.h.b16 %v458
        %v763 = vunpack.c.l.b16 %v459
        %v764 = vunpack.c.h.b16 %v459
        %v765 = vunpack.c.l.b16 %v460
        %v766 = vunpack.c.h.b16 %v460
        %v767 = vunpack.c.l.b16 %v461
        %v768 = vunpack.c.h.b16 %v461
        %v769 = vunpack.c.l.b16 %v462
        %v770 = vunpack.c.h.b16 %v462
        %v771 = vunpack.c.l.b16 %v463
        %v772 = vunpack.c.h.b16 %v463
        %v773 = vunpack.c.l.b16 %v464
        %v774 = vunpack.c.h.b16 %v464
        %v775 = vunpack.c.l.b16 %v465
        %v776 = vunpack.c.h.b16 %v465
        %v777 = vunpack.c.l.b16 %v466
        %v778 = vunpack.c.h.b16 %v466
        %v779 = vunpack.c.l.b16 %v467
        %v780 = vunpack.c.h.b16 %v467
        %v781 = vunpack.c.l.b16 %v468
        %v782 = vunpack.c.h.b16 %v468
        %v783 = vunpack.c.l.b16 %v469
        %v784 = vunpack.c.h.b16 %v469
        %v785 = vunpack.c.l.b16 %v470
        %v786 = vunpack.c.h.b16 %v470
        %v787 = vunpack.c.l.b16 %v471
        %v788 = vunpack.c.h.b16 %v471
        %v789 = vunpack.c.l.b16 %v472
        %v790 = vunpack.c.h.b16 %v472
        %v791 = vunpack.c.l.b16 %v473
        %v792 = vunpack.c.h.b16 %v473
        %v793 = vunpack.c.l.b16 %v474
        %v794 = vunpack.c.h.b16 %v474
        %v795 = vunpack.c.l.b16 %v475
        %v796 = vunpack.c.h.b16 %v475
        %v797 = vunpack.c.l.b16 %v476
        %v798 = vunpack.c.h.b16 %v476
        %v799 = vunpack.c.l.b16 %v477
        %v800 = vunpack.c.h.b16 %v477
        %v801 = vunpack.c.l.b16 %v478
        %v802 = vunpack.c.h.b16 %v478
        %v803 = vunpack.c.l.b16 %v479
        %v804 = vunpack.c.h.b16 %v479
        %v805 = vunpack.c.l.b16 %v480
        %v806 = vunpack.c.h.b16 %v480
        %v807 = vunpack.c.l.b16 %v481
        %v808 = vunpack.c.h.b16 %v481
        %v809 = vunpack.c.l.b16 %v482
        %v810 = vunpack.c.h.b16 %v482
        %v811 = vunpack.c.l.b16 %v483
        %v812 = vunpack.c.h.b16 %v483
        %v813 = vunpack.c.l.b16 %v484
        %v814 = vunpack.c.h.b16 %v484
        %v815 = vunpack.c.l.b16 %v485
        %v816 = vunpack.c.h.b16 %v485
        %v817 = vunpack.c.l.b16 %v486
        %v818 = vunpack.c.h.b16 %v486
        %v819 = vunpack.c.l.b16 %v487
        %v820 = vunpack.c.h.b16 %v487
        %v821 = vunpack.c.l.b16 %v488
        %v822 = vunpack.c.h.b16 %v488
        %v823 = vunpack.c.l.b16 %v489
        %v824 = vunpack.c.h.b16 %v489
        %v825 = vunpack.c.l.b16 %v490
        %v826 = vunpack.c.h.b16 %v490
        %v827 = vunpack.c.l.b16 %v491
        %v828 = vunpack.c.h.b16 %v491
        %v829 = vunpack.c.l.b16 %v492
        %v830 = vunpack.c.h.b16 %v492
        %v831 = vunpack.c.l.b16 %v493
        %v832 = vunpack.c.h.b16 %v493
        %v833 = vunpack.c.l.b16 %v494
        %v834 = vunpack.c.h.b16 %v494
        %v835 = vunpack.c.l.b16 %v495
        %v836 = vunpack.c.h.b16 %v495
        %v837 = vunpack.c.l.b16 %v496
        %v838 = vunpack.c.h.b16 %v496
        %v839 = vunpack.c.l.b16 %v497
        %v840 = vunpack.c.h.b16 %v497
        %v841 = vunpack.c.l.b16 %v498
        %v842 = vunpack.c.h.b16 %v498
        %v843 = vunpack.c.l.b16 %v499
        %v844 = vunpack.c.h.b16 %v499
        %v845 = vunpack.c.l.b16 %v500
        %v846 = vunpack.c.h.b16 %v500
        %v847 = vunpack.c.l.b16 %v501
        %v848 = vunpack.c.h.b16 %v501
        %v849 = vunpack.c.l.b16 %v502
        %v850 = vunpack.c.h.b16 %v502
        %v851 = vunpack.c.l.b16 %v503
        %v852 = vunpack.c.h.b16 %v503
        %v853 = vunpack.c.l.b16 %v504
        %v854 = vunpack.c.h.b16 %v504
        %v855 = vunpack.c.l.b16 %v505
        %v856 = vunpack.c.h.b16 %v505
        %v857 = vunpack.c.l.b16 %v506
        %v858 = vunpack.c.h.b16 %v506
        %v859 = vunpack.c.l.b16 %v507
        %v860 = vunpack.c.h.b16 %v507
        %v861 = vunpack.c.l.b16 %v508
        %v862 = vunpack.c.h.b16 %v508
        %v863 = vunpack.c.l.b16 %v509
        %v864 = vunpack.c.h.b16 %v509
        %v865 = vunpack.c.l.b16 %v510
        %v866 = vunpack.c.h.b16 %v510
        %v867 = vunpack.c.l.b16 %v511
        %v868 = vunpack.c.h.b16 %v511
        %v869 = vunpack.c.l.b16 %v512
        %v870 = vunpack.c.h.b16 %v512
        %v871 = vunpack.c.l.b16 %v513
        %v872 = vunpack.c.h.b16 %v513
        %v873 = vunpack.c.l.b16 %v514
        %v874 = vunpack.c.h.b16 %v514
        %v875 = vunpack.c.l.b16 %v515
        %v876 = vunpack.c.h.b16 %v515
        %v877 = vunpack.c.l.b16 %v516
        %v878 = vunpack.c.h.b16 %v516
        %v879 = vunpack.c.l.b16 %v517
        %v880 = vunpack.c.h.b16 %v517
        %v881 = vunpack.c.l.b16 %v518
        %v882 = vunpack.c.h.b16 %v518
        %v883 = vunpack.c.l.b16 %v519
        %v884 = vunpack.c.h.b16 %v519
        %v885 = vunpack.c.l.b16 %v520
        %v886 = vunpack.c.h.b16 %v520
        %v887 = vunpack.c.l.b16 %v521
        %v888 = vunpack.c.h.b16 %v521
        %v889 = vunpack.c.l.b16 %v522
        %v890 = vunpack.c.h.b16 %v522
        %v891 = vunpack.c.l.b16 %v523
        %v892 = vunpack.c.h.b16 %v523
        %v893 = vunpack.c.l.b16 %v524
        %v894 = vunpack.c.h.b16 %v524
        %v895 = vunpack.c.l.b16 %v525
        %v896 = vunpack.c.h.b16 %v525
        %v897 = vunpack.c.l.b16 %v526
        %v898 = vunpack.c.h.b16 %v526
        %v899 = vunpack.c.l.b16 %v527
        %v900 = vunpack.c.h.b16 %v527
        %v901 = vunpack.c.l.b16 %v528
        %v902 = vunpack.c.h.b16 %v528
        %v903 = vunpack.c.l.b16 %v529
        %v904 = vunpack.c.h.b16 %v529
        %v905 = vunpack.c.l.b16 %v530
        %v906 = vunpack.c.h.b16 %v530
        %v907 = vunpack.c.l.b16 %v531
        %v908 = vunpack.c.h.b16 %v531
        %v909 = vunpack.c.l.b16 %v532
        %v910 = vunpack.c.h.b16 %v532
        %v911 = vunpack.c.l.b16 %v533
        %v912 = vunpack.c.h.b16 %v533
        %v913 = vunpack.c.l.b16 %v534
        %v914 = vunpack.c.h.b16 %v534
        %v915 = vunpack.c.l.b16 %v535
        %v916 = vunpack.c.h.b16 %v535
        %v917 = vunpack.c.l.b16 %v536
        %v918 = vunpack.c.h.b16 %v536
        %v919 = vunpack.c.l.b16 %v537
        %v920 = vunpack.c.h.b16 %v537
        %v921 = vunpack.c.l.b16 %v538
        %v922 = vunpack.c.h.b16 %v538
        %v923 = vunpack.c.l.b16 %v539
        %v924 = vunpack.c.h.b16 %v539
        %v925 = vunpack.c.l.b16 %v540
        %v926 = vunpack.c.h.b16 %v540
        %v927 = vunpack.c.l.b16 %v541
        %v928 = vunpack.c.h.b16 %v541
        %v929 = vunpack.c.l.b16 %v542
        %v930 = vunpack.c.h.b16 %v542
        %v931 = vunpack.c.l.b16 %v543
        %v932 = vunpack.c.h.b16 %v543
        %v933 = vunpack.c.l.b16 %v544
        %v934 = vunpack.c.h.b16 %v544
        %v935 = vunpack.c.l.b16 %v545
        %v936 = vunpack.c.h.b16 %v545
        %v937 = vunpack.c.l.b16 %v546
        %v938 = vunpack.c.h.b16 %v546
        %v939 = vunpack.c.l.b16 %v547
        %v940 = vunpack.c.h.b16 %v547
        %v941 = vunpack.c.l.b16 %v548
        %v942 = vunpack.c.h.b16 %v548
        %v943 = vunpack.c.l.b16 %v549
        %v944 = vunpack.c.h.b16 %v549
        %v945 = vunpack.c.l.b16 %v550
        %v946 = vunpack.c.h.b16 %v550
        %v947 = vunpack.c.l.b16 %v551
        %v948 = vunpack.c.h.b16 %v551
        %v949 = vunpack.c.l.b16 %v552
        %v950 = vunpack.c.h.b16 %v552
        %v951 = vunpack.c.l.b16 %v553
        %v952 = vunpack.c.h.b16 %v553
        %v953 = vunpack.c.l.b16 %v554
        %v954 = vunpack.c.h.b16 %v554
        %v955 = vunpack.c.l.b16 %v555
        %v956 = vunpack.c.h.b16 %v555
        %v957 = vunpack.c.l.b16 %v556
        %v958 = vunpack.c.h.b16 %v556
        %v959 = vunpack.c.l.b16 %v557
        %v960 = vunpack.c.h.b16 %v557
        %v961 = vunpack.c.l.b16 %v558
        %v962 = vunpack.c.h.b16 %v558
        %v963 = vunpack.c.l.b16 %v559
        %v964 = vunpack.c.h.b16 %v559
        %v965 = vunpack.c.l.b16 %v560
        %v966 = vunpack.c.h.b16 %v560
        %v967 = vpack.c.b16 %v715, %v711
        %v968 = vpack.c.b16 %v716, %v712
        %v969 = vpack.c.b16 %v717, %v713
        %v970 = vpack.c.b16 %v718, %v714
        %v971 = vpack.c.b16 %v723, %v719
        %v972 = vpack.c.b16 %v724, %v720
        %v973 = vpack.c.b16 %v725, %v721
        %v974 = vpack.c.b16 %v726, %v722
        %v975 = vpack.c.b16 %v731, %v727
        %v976 = vpack.c.b16 %v732, %v728
        %v977 = vpack.c.b16 %v733, %v729
        %v978 = vpack.c.b16 %v734, %v730
        %v979 = vpack.c.b16 %v739, %v735
        %v980 = vpack.c.b16 %v740, %v736
        %v981 = vpack.c.b16 %v741, %v737
        %v982 = vpack.c.b16 %v742, %v738
        %v983 = vpack.c.b16 %v747, %v743
        %v984 = vpack.c.b16 %v748, %v744
        %v985 = vpack.c.b16 %v749, %v745
        %v986 = vpack.c.b16 %v750, %v746
        %v987 = vpack.c.b16 %v755, %v751
        %v988 = vpack.c.b16 %v756, %v752
        %v989 = vpack.c.b16 %v757, %v753
        %v990 = vpack.c.b16 %v758, %v754
        %v991 = vpack.c.b16 %v763, %v759
        %v992 = vpack.c.b16 %v764, %v760
        %v993 = vpack.c.b16 %v765, %v761
        %v994 = vpack.c.b16 %v766, %v762
        %v995 = vpack.c.b16 %v771, %v767
        %v996 = vpack.c.b16 %v772, %v768
        %v997 = vpack.c.b16 %v773, %v769
        %v998 = vpack.c.b16 %v774, %v770
        %v999 = vpack.c.b16 %v779, %v775
        %v1000 = vpack.c.b16 %v780, %v776
        %v1001 = vpack.c.b16 %v781, %v777
        %v1002 = vpack.c.b16 %v782, %v778
        %v1003 = vpack.c.b16 %v787, %v783
        %v1004 = vpack.c.b16 %v788, %v784
        %v1005 = vpack.c.b16 %v789, %v785
        %v1006 = vpack.c.b16 %v790, %v786
        %v1007 = vpack.c.b16 %v795, %v791
        %v1008 = vpack.c.b16 %v796, %v792
        %v1009 = vpack.c.b16 %v797, %v793
        %v1010 = vpack.c.b16 %v798, %v794
        %v1011 = vpack.c.b16 %v803, %v799
        %v1012 = vpack.c.b16 %v804, %v800
        %v1013 = vpack.c.b16 %v805, %v801
        %v1014 = vpack.c.b16 %v806, %v802
        %v1015 = vpack.c.b16 %v811, %v807
        %v1016 = vpack.c.b16 %v812, %v808
        %v1017 = vpack.c.b16 %v813, %v809
        %v1018 = vpack.c.b16 %v814, %v810
        %v1019 = vpack.c.b16 %v819, %v815
        %v1020 = vpack.c.b16 %v820, %v816
        %v1021 = vpack.c.b16 %v821, %v817
        %v1022 = vpack.c.b16 %v822, %v818
        %v1023 = vpack.c.b16 %v827, %v823
        %v1024 = vpack.c.b16 %v828, %v824
        %v1025 = vpack.c.b16 %v829, %v825
        %v1026 = vpack.c.b16 %v830, %v826
        %v1027 = vpack.c.b16 %v835, %v831
        %v1028 = vpack.c.b16 %v836, %v832
        %v1029 = vpack.c.b16 %v837, %v833
        %v1030 = vpack.c.b16 %v838, %v834
        %v1031 = vpack.c.b16 %v843, %v839
        %v1032 = vpack.c.b16 %v844, %v840
        %v1033 = vpack.c.b16 %v845, %v841
        %v1034 = vpack.c.b16 %v846, %v842
        %v1035 = vpack.c.b16 %v851, %v847
        %v1036 = vpack.c.b16 %v852, %v848
        %v1037 = vpack.c.b16 %v853, %v849
        %v1038 = vpack.c.b16 %v854, %v850
        %v1039 = vpack.c.b16 %v859, %v855
        %v1040 = vpack.c.b16 %v860, %v856
        %v1041 = vpack.c.b16 %v861, %v857
        %v1042 = vpack.c.b16 %v862, %v858
        %v1043 = vpack.c.b16 %v867, %v863
        %v1044 = vpack.c.b16 %v868, %v864
        %v1045 = vpack.c.b16 %v869, %v865
        %v1046 = vpack.c.b16 %v870, %v866
        %v1047 = vpack.c.b16 %v875, %v871
        %v1048 = vpack.c.b16 %v876, %v872
        %v1049 = vpack.c.b16 %v877, %v873
        %v1050 = vpack.c.b16 %v878, %v874
        %v1051 = vpack.c.b16 %v883, %v879
        %v1052 = vpack.c.b16 %v884, %v880
        %v1053 = vpack.c.b16 %v885, %v881
        %v1054 = vpack.c.b16 %v886, %v882
        %v1055 = vpack.c.b16 %v891, %v887
        %v1056 = vpack.c.b16 %v892, %v888
        %v1057 = vpack.c.b16 %v893, %v889
        %v1058 = vpack.c.b16 %v894, %v890
        %v1059 = vpack.c.b16 %v899, %v895
        %v1060 = vpack.c.b16 %v900, %v896
        %v1061 = vpack.c.b16 %v901, %v897
        %v1062 = vpack.c.b16 %v902, %v898
        %v1063 = vpack.c.b16 %v907, %v903
        %v1064 = vpack.c.b16 %v908, %v904
        %v1065 = vpack.c.b16 %v909, %v905
        %v1066 = vpack.c.b16 %v910, %v906
        %v1067 = vpack.c.b16 %v915, %v911
        %v1068 = vpack.c.b16 %v916, %v912
        %v1069 = vpack.c.b16 %v917, %v913
        %v1070 = vpack.c.b16 %v918, %v914
        %v1071 = vpack.c.b16 %v923, %v919
        %v1072 = vpack.c.b16 %v924, %v920
        %v1073 = vpack.c.b16 %v925, %v921
        %v1074 = vpack.c.b16 %v926, %v922
        %v1075 = vpack.c.b16 %v931, %v927
        %v1076 = vpack.c.b16 %v932, %v928
        %v1077 = vpack.c.b16 %v933, %v929
        %v1078 = vpack.c.b16 %v934, %v930
        %v1079 = vpack.c.b16 %v939, %v935
        %v1080 = vpack.c.b16 %v940, %v936
        %v1081 = vpack.c.b16 %v941, %v937
        %v1082 = vpack.c.b16 %v942, %v938
        %v1083 = vpack.c.b16 %v947, %v943
        %v1084 = vpack.c.b16 %v948, %v944
        %v1085 = vpack.c.b16 %v949, %v945
        %v1086 = vpack.c.b16 %v950, %v946
        %v1087 = vpack.c.b16 %v955, %v951
        %v1088 = vpack.c.b16 %v956, %v952
        %v1089 = vpack.c.b16 %v957, %v953
        %v1090 = vpack.c.b16 %v958, %v954
        %v1091 = vpack.c.b16 %v963, %v959
        %v1092 = vpack.c.b16 %v964, %v960
        %v1093 = vpack.c.b16 %v965, %v961
        %v1094 = vpack.c.b16 %v966, %v962
        %1223 = vmatprep.subr.bf16.mxu0 %v968
        %1224 = vmatpush1.bf16.msra.mxu0 %v967
        %1225 = vmatprep.subr.bf16.mxu0 %v972
        %1226 = vmatpush1.bf16.msra.mxu0 %v971
        %1227 = vmatprep.subr.bf16.mxu0 %v976
        %1228 = vmatpush1.bf16.msra.mxu0 %v975
        %1229 = vmatprep.subr.bf16.mxu0 %v980
        %1230 = vmatpush1.bf16.msra.mxu0 %v979
        %1231 = vmatprep.subr.bf16.mxu0 %v984
        %1232 = vmatpush1.bf16.msra.mxu0 %v983
        %1233 = vmatprep.subr.bf16.mxu0 %v988
        %1234 = vmatpush1.bf16.msra.mxu0 %v987
        %1235 = vmatprep.subr.bf16.mxu0 %v992
        %1236 = vmatpush1.bf16.msra.mxu0 %v991
        %1237 = vmatprep.subr.bf16.mxu0 %v996
        %1238 = vmatpush1.bf16.msra.mxu0 %v995
        %1239 = vmatprep.subr.bf16.mxu0 %v1000
        %1240 = vmatpush1.bf16.msra.mxu0 %v999
        %1241 = vmatprep.subr.bf16.mxu0 %v1004
        %1242 = vmatpush1.bf16.msra.mxu0 %v1003
        %1243 = vmatprep.subr.bf16.mxu0 %v1008
        %1244 = vmatpush1.bf16.msra.mxu0 %v1007
        %1245 = vmatprep.subr.bf16.mxu0 %v1012
        %1246 = vmatpush1.bf16.msra.mxu0 %v1011
        %1247 = vmatprep.subr.bf16.mxu0 %v1016
        %1248 = vmatpush1.bf16.msra.mxu0 %v1015
        %1249 = vmatprep.subr.bf16.mxu0 %v1020
        %1250 = vmatpush1.bf16.msra.mxu0 %v1019
        %1251 = vmatprep.subr.bf16.mxu0 %v1024
        %1252 = vmatpush1.bf16.msra.mxu0 %v1023
        %1253 = vmatprep.subr.bf16.mxu0 %v1028
        %1254 = vmatpush1.bf16.msra.mxu0 %v1027
        %1255 = vmatprep.mubr.bf16.mxu0 %v430
        %1256 = vmatmul.mubr.bf16.gmra.mrb[0].mxu0 %v429
        %v1257 = vpop.f32.mrb[0].mxu0
        %v1258 = vadd.f32 %v566, %v1257
        %v1259 = vpop.f32.mrb[0].mxu0
        %v1260 = vadd.f32 %v570, %v1259
        %v1261 = vpop.f32.mrb[0].mxu0
        %v1262 = vpop.f32.mrb[0].mxu0
        %1263 = vdwg.mxu0
        %1264 = vmatprep.subr.bf16.mxu0 %v1032
        %1265 = vmatpush1.bf16.msra.mxu0 %v1031
        %1266 = vmatprep.subr.bf16.mxu0 %v1036
        %1267 = vmatpush1.bf16.msra.mxu0 %v1035
        %1268 = vmatprep.subr.bf16.mxu0 %v1040
        %1269 = vmatpush1.bf16.msra.mxu0 %v1039
        %1270 = vmatprep.subr.bf16.mxu0 %v1044
        %1271 = vmatpush1.bf16.msra.mxu0 %v1043
        %1272 = vmatprep.subr.bf16.mxu0 %v1048
        %1273 = vmatpush1.bf16.msra.mxu0 %v1047
        %1274 = vmatprep.subr.bf16.mxu0 %v1052
        %1275 = vmatpush1.bf16.msra.mxu0 %v1051
        %1276 = vmatprep.subr.bf16.mxu0 %v1056
        %1277 = vmatpush1.bf16.msra.mxu0 %v1055
        %1278 = vmatprep.subr.bf16.mxu0 %v1060
        %1279 = vmatpush1.bf16.msra.mxu0 %v1059
        %1280 = vmatprep.subr.bf16.mxu0 %v1064
        %1281 = vmatpush1.bf16.msra.mxu0 %v1063
        %1282 = vmatprep.subr.bf16.mxu0 %v1068
        %1283 = vmatpush1.bf16.msra.mxu0 %v1067
        %1284 = vmatprep.subr.bf16.mxu0 %v1072
        %1285 = vmatpush1.bf16.msra.mxu0 %v1071
        %1286 = vmatprep.subr.bf16.mxu0 %v1076
        %1287 = vmatpush1.bf16.msra.mxu0 %v1075
        %1288 = vmatprep.subr.bf16.mxu0 %v1080
        %1289 = vmatpush1.bf16.msra.mxu0 %v1079
        %1290 = vmatprep.subr.bf16.mxu0 %v1084
        %1291 = vmatpush1.bf16.msra.mxu0 %v1083
        %1292 = vmatprep.subr.bf16.mxu0 %v1088
        %1293 = vmatpush1.bf16.msra.mxu0 %v1087
        %1294 = vmatprep.subr.bf16.mxu0 %v1092
        %1295 = vmatpush1.bf16.msra.mxu0 %v1091
        %1296 = vmatprep.mubr.bf16.mxu0 %v432
        %1297 = vmatmul.mubr.bf16.gmra.mrb[0].mxu0 %v431
        %v1298 = vpop.f32.mrb[0].mxu0
        %v1299 = vadd.f32 %v1258, %v1298
        %v1300 = vpop.f32.mrb[0].mxu0
        %v1301 = vadd.f32 %v1260, %v1300
        %v1302 = vpop.f32.mrb[0].mxu0
        %v1303 = vpop.f32.mrb[0].mxu0
        %1304 = vdwg.mxu0
        %1305 = vmatprep.subr.bf16.mxu0 %v970
        %1306 = vmatpush1.bf16.msra.mxu0 %v969
        %1307 = vmatprep.subr.bf16.mxu0 %v974
        %1308 = vmatpush1.bf16.msra.mxu0 %v973
        %1309 = vmatprep.subr.bf16.mxu0 %v978
        %1310 = vmatpush1.bf16.msra.mxu0 %v977
        %1311 = vmatprep.subr.bf16.mxu0 %v982
        %1312 = vmatpush1.bf16.msra.mxu0 %v981
        %1313 = vmatprep.subr.bf16.mxu0 %v986
        %1314 = vmatpush1.bf16.msra.mxu0 %v985
        %1315 = vmatprep.subr.bf16.mxu0 %v990
        %1316 = vmatpush1.bf16.msra.mxu0 %v989
        %1317 = vmatprep.subr.bf16.mxu0 %v994
        %1318 = vmatpush1.bf16.msra.mxu0 %v993
        %1319 = vmatprep.subr.bf16.mxu0 %v998
        %1320 = vmatpush1.bf16.msra.mxu0 %v997
        %1321 = vmatprep.subr.bf16.mxu0 %v1002
        %1322 = vmatpush1.bf16.msra.mxu0 %v1001
        %1323 = vmatprep.subr.bf16.mxu0 %v1006
        %1324 = vmatpush1.bf16.msra.mxu0 %v1005
        %1325 = vmatprep.subr.bf16.mxu0 %v1010
        %1326 = vmatpush1.bf16.msra.mxu0 %v1009
        %1327 = vmatprep.subr.bf16.mxu0 %v1014
        %1328 = vmatpush1.bf16.msra.mxu0 %v1013
        %1329 = vmatprep.subr.bf16.mxu0 %v1018
        %1330 = vmatpush1.bf16.msra.mxu0 %v1017
        %1331 = vmatprep.subr.bf16.mxu0 %v1022
        %1332 = vmatpush1.bf16.msra.mxu0 %v1021
        %1333 = vmatprep.subr.bf16.mxu0 %v1026
        %1334 = vmatpush1.bf16.msra.mxu0 %v1025
        %1335 = vmatprep.subr.bf16.mxu0 %v1030
        %1336 = vmatpush1.bf16.msra.mxu0 %v1029
        %1337 = vmatprep.mubr.bf16.mxu0 %v430
        %1338 = vmatmul.mubr.bf16.gmra.mrb[0].mxu0 %v429
        %v1339 = vpop.f32.mrb[0].mxu0
        %v1340 = vadd.f32 %v574, %v1339
        %v1341 = vpop.f32.mrb[0].mxu0
        %v1342 = vadd.f32 %v578, %v1341
        %v1343 = vpop.f32.mrb[0].mxu0
        %v1344 = vpop.f32.mrb[0].mxu0
        %1345 = vdwg.mxu0
        %1346 = vmatprep.subr.bf16.mxu0 %v1034
        %1347 = vmatpush1.bf16.msra.mxu0 %v1033
        %1348 = vmatprep.subr.bf16.mxu0 %v1038
        %1349 = vmatpush1.bf16.msra.mxu0 %v1037
        %1350 = vmatprep.subr.bf16.mxu0 %v1042
        %1351 = vmatpush1.bf16.msra.mxu0 %v1041
        %1352 = vmatprep.subr.bf16.mxu0 %v1046
        %1353 = vmatpush1.bf16.msra.mxu0 %v1045
        %1354 = vmatprep.subr.bf16.mxu0 %v1050
        %1355 = vmatpush1.bf16.msra.mxu0 %v1049
        %1356 = vmatprep.subr.bf16.mxu0 %v1054
        %1357 = vmatpush1.bf16.msra.mxu0 %v1053
        %1358 = vmatprep.subr.bf16.mxu0 %v1058
        %1359 = vmatpush1.bf16.msra.mxu0 %v1057
        %1360 = vmatprep.subr.bf16.mxu0 %v1062
        %1361 = vmatpush1.bf16.msra.mxu0 %v1061
        %1362 = vmatprep.subr.bf16.mxu0 %v1066
        %1363 = vmatpush1.bf16.msra.mxu0 %v1065
        %1364 = vmatprep.subr.bf16.mxu0 %v1070
        %1365 = vmatpush1.bf16.msra.mxu0 %v1069
        %1366 = vmatprep.subr.bf16.mxu0 %v1074
        %1367 = vmatpush1.bf16.msra.mxu0 %v1073
        %1368 = vmatprep.subr.bf16.mxu0 %v1078
        %1369 = vmatpush1.bf16.msra.mxu0 %v1077
        %1370 = vmatprep.subr.bf16.mxu0 %v1082
        %1371 = vmatpush1.bf16.msra.mxu0 %v1081
        %1372 = vmatprep.subr.bf16.mxu0 %v1086
        %1373 = vmatpush1.bf16.msra.mxu0 %v1085
        %1374 = vmatprep.subr.bf16.mxu0 %v1090
        %1375 = vmatpush1.bf16.msra.mxu0 %v1089
        %1376 = vmatprep.subr.bf16.mxu0 %v1094
        %1377 = vmatpush1.bf16.msra.mxu0 %v1093
        %1378 = vmatprep.mubr.bf16.mxu0 %v432
        %1379 = vmatmul.mubr.bf16.gmra.mrb[0].mxu0 %v431
        %v1380 = vpop.f32.mrb[0].mxu0
        %v1381 = vadd.f32 %v1340, %v1380
        %v1382 = vpop.f32.mrb[0].mxu0
        %v1383 = vadd.f32 %v1342, %v1382
        %v1384 = vpop.f32.mrb[0].mxu0
        %v1385 = vpop.f32.mrb[0].mxu0
        %1386 = vdwg.mxu0
        %v1387 = vld [vmem:[%s306] sm:$0xf]
        %v1389 = vlaneseq
        %v1390 = vshrl.u32 %v1389, 7
        %v1391 = vsub.s32 0, %v1390
        %v1392 = vrot.slane %v1387, %v1391
        %v1393 = vlaneseq
        %v1394 = vshrl.u32 %v1393, 7
        %v1395 = vsub.s32 1, %v1394
        %v1396 = vrot.slane %v1387, %v1395
        %v1397 = vlaneseq
        %v1398 = vshrl.u32 %v1397, 7
        %v1399 = vsub.s32 2, %v1398
        %v1400 = vrot.slane %v1387, %v1399
        %v1401 = vlaneseq
        %v1402 = vshrl.u32 %v1401, 7
        %v1403 = vsub.s32 3, %v1402
        %v1404 = vrot.slane %v1387, %v1403
        %v1409 = vmul.f32 %v373, %v1392
        %v1410 = vmul.f32 %v373, %v1396
        %v1411 = vmul.f32 %v373, %v1400
        %v1412 = vmul.f32 %v373, %v1404
        %v1413 = vadd.f32 %v1299, %v1409
        %v1414 = vadd.f32 %v1301, %v1410
        %v1415 = vadd.f32 %v1381, %v1411
        %v1416 = vadd.f32 %v1383, %v1412
        %1417 = vst [vmem:[%s362] sm:$0xff] %v1413
        %1418 = vst [vmem:[%s362 + $0x8] sm:$0xff] %v1414
        %1419 = vst [vmem:[%s362 + $0x10] sm:$0xff] %v1415
        %1420 = vst [vmem:[%s362 + $0x18] sm:$0xff] %v1416
        %s1421 = sand.u32 %s171, 1
        %s1422 = scalar_lea.sflag [#allocation4], %s1421
        %s1423 = sand.u32 %s171, 1
        %s1424 = smul.addr %s1423, 32
        %s1425 = scalar_lea.vmem [#allocation10], %s1424
        // Predicated region
        $region65: #{tpu_custom_call.1} parent=43 // pred_check
          %p1426 = pneg %p181
        $region66: #{tpu_custom_call.1} parent=43 // pred_check_branch
          %1428 = sbr.rel (%p1426) target = $region68
        $region67: #{tpu_custom_call.1} parent=43 // pred_region
          %s1429 = smul.u32 4, %s22
          %s1431 = ssub.s32 512, 512
          %1432 = vsyncadd %s1422, %s1431
          %s1433 = smul.addr %s1429, 128
          %s1434 = scalar_lea.hbm %s6, %s1433
          %s1436 = sshll.u32 %s1425, 4
          %s1437 = int_to_ptr.vmem [resolvable:$true] %s1436
          %1439 = dma.vmem_to_hbm [thread:$0]  %s1437, 512, %s1434, %s1422
        $region68: #{tpu_custom_call.1} parent=43 // pred_fallthru
          _
      $region44: #{tpu_custom_call.1} parent=5 // pred_fallthru
        _
      %p1440 = scmp.le.s32.totalorder 2, %s17
      // Predicated region
      $region69: #{tpu_custom_call.1} parent=5 // pred_check
        %p1441 = pneg %p1440
      $region70: #{tpu_custom_call.1} parent=5 // pred_check_branch
        %1443 = sbr.rel (%p1441) target = $region72
      $region71: #{tpu_custom_call.1} parent=5 // pred_region
        %s1444 = ssub.s32 %s17, 2
        // Predicated region
        $region73: #{tpu_custom_call.1} parent=71 // pred_check
          %p1445 = pneg %p187
        $region74: #{tpu_custom_call.1} parent=71 // pred_check_branch
          %1447 = sbr.rel (%p1445) target = $region76
        $region75: #{tpu_custom_call.1} parent=71 // pred_region
          %s1448 = sand.u32 %s172, 1
          %s1449 = scalar_lea.sflag [#allocation4], %s1448
          %s1450 = sand.u32 %s172, 1
          %s1451 = smul.addr %s1450, 32
          %s1452 = scalar_lea.vmem [#allocation10], %s1451
          %1453 = dma.done %s1449, 512
        $region76: #{tpu_custom_call.1} parent=71 // pred_fallthru
          _
      $region72: #{tpu_custom_call.1} parent=5 // pred_fallthru
        _
    $region6: #{tpu_custom_call.1} parent=1 // loop_footer
      %s21 = sadd.s32 1, %s17
    $region7: #{tpu_custom_call.1} parent=1 // loop_footer_branch
      %16 = sbr.rel target = $region3
    $region8: #{tpu_custom_call.1} parent=1 // loop_exit
      _
    %1454 = vsyncpa [#allocation3], 1
    %s1455 = scalar_lea.sflag [#allocation3], 1
    %1456 = vsyncpa %s1455, 1
    %1457 = vsyncpa [#allocation6], 1
    %1458 = vsyncpa [#allocation4], 1
    %s1459 = scalar_lea.sflag [#allocation4], 1
    %1460 = vsyncpa %s1459, 1

</llo_original>
